<compile_context>
chip_gen: v7x
topology: tpu7x:2x2x1
jax: 0.10.0
libtpu: 0.0.40
codegen_flags: <defaults>
</compile_context>

<pallas_src>
import functools

import jax
import jax.numpy as jnp
from jax.experimental import pallas as pl
from jax.experimental.pallas import tpu as pltpu

LANE = 128


def _round_up(v, m):
    return (v + m - 1) // m * m


def _vmem_capacity_bytes():
    try:
        info = pltpu.get_tpu_info()
        cap = getattr(info, "vmem_capacity_bytes", None)
        if cap:
            return int(cap)
    except Exception:
        pass
    return 64 << 20          # conservative fallback (v7x per-TC VMEM)


# -----------------------------------------------------------------------------
# VMEM footprint models (bytes). bf16 blocks are double-buffered by the Pallas
# pipeline; f32 intermediates live once inside the compute body.
# -----------------------------------------------------------------------------
def _fused_footprint(bblk, np_, fp, op):
    per_elem = (2 * 2 * (np_ * np_ + np_ * fp + np_ * op)    # dbl-buf bf16 A, X, out
                + 4 * np_ * fp                               # ax (f32)
                + (4 + 2 + 4 + 4) * np_ * op)                # h f32, h bf16, hw f32, y f32
    fixed = 2 * 2 * (fp * op + op * op) + 2 * 2 * 4 * op     # dbl-buf weights + f32 biases
    return bblk * per_elem + fixed


def _pass1_footprint(bblk, tile_n, np_, fp, op):
    per_elem = (2 * 2 * tile_n * np_                         # A row tile, dbl-buf bf16
                + 2 * 2 * np_ * fp                           # X, dbl-buf bf16
                + 2 * 2 * tile_n * op                        # HW out tile, dbl-buf bf16
                + 4 * tile_n * fp                            # ax f32
                + (4 + 2 + 4) * tile_n * op)                 # h f32, h bf16, hw f32
    fixed = 2 * 2 * (fp * op + op * op) + 2 * 4 * op
    return bblk * per_elem + fixed


def _pass2_footprint(bblk, tile_n, np_, op):
    per_elem = (2 * 2 * tile_n * np_                         # A row tile
                + 2 * 2 * np_ * op                           # HW full
                + 2 * 2 * tile_n * op                        # out tile
                + 4 * tile_n * op)                           # y f32
    fixed = 2 * 4 * op
    return bblk * per_elem + fixed


# -----------------------------------------------------------------------------
# Kernels
# -----------------------------------------------------------------------------
def _gcnn_fused_kernel(x_ref, adj_ref, w1_ref, b1_ref, w2_ref, b2_ref, out_ref, *,
                       reassociate_layer1):
    a = adj_ref[...]          # (Bblk, Np, Np) bf16
    x = x_ref[...]            # (Bblk, Np, Fp) bf16
    cdt = x.dtype

    # ---- Layer 1: GCNConv(F -> O) + ReLU ------------------------------------
    if reassociate_layer1:
        # (A @ X) @ W1: the dominant N×N matmul contracts only F lanes.
        ax = jnp.einsum('bnm,bmf->bnf', a, x, preferred_element_type=jnp.float32)
        h = jnp.einsum('bnf,fo->bno', ax.astype(cdt), w1_ref[...],
                       preferred_element_type=jnp.float32)
    else:
        xw = jnp.einsum('bnf,fo->bno', x, w1_ref[...],
                        preferred_element_type=jnp.float32)
        h = jnp.einsum('bnm,bmo->bno', a, xw.astype(cdt),
                       preferred_element_type=jnp.float32)
    h = jnp.maximum(h + b1_ref[...], 0.0).astype(cdt)        # bias is f32

    # ---- Layer 2: GCNConv(O -> O) + ReLU ------------------------------------
    hw = jnp.einsum('bno,op->bnp', h, w2_ref[...],
                    preferred_element_type=jnp.float32)
    y = jnp.einsum('bnm,bmp->bnp', a, hw.astype(cdt),
                   preferred_element_type=jnp.float32)
    out_ref[...] = jnp.maximum(y + b2_ref[...], 0.0).astype(out_ref.dtype)


def _gcnn_pass1_kernel(adj_ref, x_ref, w1_ref, b1_ref, w2_ref, hw_ref):
    """HW_tile = relu((A_tile @ X) @ W1 + b1) @ W2."""
    a = adj_ref[...]          # (Bblk, Tn, Np)
    x = x_ref[...]            # (Bblk, Np, Fp)
    cdt = x.dtype
    ax = jnp.einsum('btm,bmf->btf', a, x, preferred_element_type=jnp.float32)
    h = jnp.einsum('btf,fo->bto', ax.astype(cdt), w1_ref[...],
                   preferred_element_type=jnp.float32)
    h = jnp.maximum(h + b1_ref[...], 0.0).astype(cdt)
    hw = jnp.einsum('bto,op->btp', h, w2_ref[...],
                    preferred_element_type=jnp.float32)
    hw_ref[...] = hw.astype(hw_ref.dtype)


def _gcnn_pass2_kernel(adj_ref, hw_ref, b2_ref, out_ref):
    """Y_tile = relu(A_tile @ HW + b2)."""
    a = adj_ref[...]          # (Bblk, Tn, Np)
    hw = hw_ref[...]          # (Bblk, Np, Op)
    y = jnp.einsum('btm,bmo->bto', a, hw, preferred_element_type=jnp.float32)
    out_ref[...] = jnp.maximum(y + b2_ref[...], 0.0).astype(out_ref.dtype)


# -----------------------------------------------------------------------------
# Host-side wrappers
# -----------------------------------------------------------------------------
def _build_norm_adj_padded(edge_idx, edge_weights, n_nodes, n_pad, out_dtype):
    """edge_idx: (2, E) int [source; target], edge_weights: (E,) float.

    Scatter + degree normalization in f32, directly into the lane-padded
    (n_pad, n_pad) buffer; single cast to out_dtype. Padded rows/cols are
    exactly zero (deg == 0), so real-node outputs are unaffected."""
    src = edge_idx[0]
    dst = edge_idx[1]
    a = jnp.zeros((n_pad, n_pad), jnp.float32).at[dst, src].add(
        edge_weights.astype(jnp.float32))
    self_loops = (jnp.arange(n_pad) < n_nodes).astype(jnp.float32)
    a = a + jnp.diag(self_loops)                      # self loops, weight 1
    deg = a.sum(axis=1)
    dinv = jnp.where(deg > 0.0, jax.lax.rsqrt(deg), 0.0)
    return (dinv[:, None] * a * dinv[None, :]).astype(out_dtype)


def build_norm_adj(edge_idx, edge_weights, n_nodes):
    """Unpadded f32 normalized adjacency (for the reference)."""
    return _build_norm_adj_padded(edge_idx, edge_weights, n_nodes, n_nodes,
                                  jnp.float32)


def _forward_fused(xp, ap, w1p, b1p, w2p, b2p, B, N, O,
                   n_pad, f_pad, o_pad, out_dtype, budget):
    fixed = _fused_footprint(0, n_pad, f_pad, o_pad)
    per_elem = _fused_footprint(1, n_pad, f_pad, o_pad) - fixed
    bblk = max(1, (budget - fixed) // per_elem)
    # Keep the grid >= 2 steps so both v7x TensorCores get work.
    bblk = int(min(bblk, B, max(1, (B + 1) // 2)))

    b_pad = _round_up(B, bblk)
    if b_pad != B:                                   # remainder batch block
        xp = jnp.pad(xp, ((0, b_pad - B), (0, 0), (0, 0)))
        ap = jnp.pad(ap, ((0, b_pad - B), (0, 0), (0, 0)))

    grid = (b_pad // bblk,)
    footprint = _fused_footprint(bblk, n_pad, f_pad, o_pad)
    vmem_limit = int(min(_vmem_capacity_bytes(),
                         max(32 << 20, footprint + (8 << 20))))

    flops = 2 * b_pad * n_pad * (n_pad * f_pad + f_pad * o_pad
                                 + o_pad * o_pad + n_pad * o_pad)
    bytes_accessed = (b_pad * (n_pad * n_pad + n_pad * f_pad + n_pad * o_pad) * 2
                      + (f_pad * o_pad + o_pad * o_pad) * 2 + 2 * o_pad * 4)

    kernel = functools.partial(_gcnn_fused_kernel,
                               reassociate_layer1=(f_pad <= o_pad))
    out = pl.pallas_call(
        kernel,
        out_shape=jax.ShapeDtypeStruct((b_pad, n_pad, o_pad), out_dtype),
        grid_spec=pltpu.PrefetchScalarGridSpec(
            num_scalar_prefetch=0,
            grid=grid,
            in_specs=[
                pl.BlockSpec((bblk, n_pad, f_pad), lambda b: (b, 0, 0)),   # x
                pl.BlockSpec((bblk, n_pad, n_pad), lambda b: (b, 0, 0)),   # Ahat
                pl.BlockSpec((f_pad, o_pad), lambda b: (0, 0)),            # W1
                pl.BlockSpec((1, o_pad), lambda b: (0, 0)),                # b1
                pl.BlockSpec((o_pad, o_pad), lambda b: (0, 0)),            # W2
                pl.BlockSpec((1, o_pad), lambda b: (0, 0)),                # b2
            ],
            out_specs=pl.BlockSpec((bblk, n_pad, o_pad), lambda b: (b, 0, 0)),
        ),
        compiler_params=pltpu.CompilerParams(
            dimension_semantics=("parallel",),
            vmem_limit_bytes=vmem_limit),
        cost_estimate=pl.CostEstimate(
            flops=flops, transcendentals=0, bytes_accessed=bytes_accessed),
    )(xp, ap, w1p, b1p, w2p, b2p)
    return out[:B, :N, :O]


def _forward_row_tiled(xp, ap, w1p, b1p, w2p, b2p, B, N, O,
                       n_pad, f_pad, o_pad, out_dtype, budget, row_tile):
    cdt = xp.dtype
    if row_tile is None:
        tile_n = LANE
        t = LANE
        while t <= n_pad:
            if n_pad % t == 0 and _pass1_footprint(1, t, n_pad, f_pad, o_pad) <= budget:
                tile_n = t
            t += LANE
    else:
        tile_n = int(row_tile)
        assert n_pad % tile_n == 0 and tile_n % 8 == 0, (n_pad, tile_n)
    n_tiles = n_pad // tile_n
    bblk = 1   # TODO(synk): batch-block the row-tiled path too when VMEM allows.

    grid = (B, n_tiles)
    dims = ("parallel", "parallel")
    cap = _vmem_capacity_bytes()
    vmem1 = int(min(cap, max(32 << 20,
                             _pass1_footprint(bblk, tile_n, n_pad, f_pad, o_pad) + (8 << 20))))
    vmem2 = int(min(cap, max(32 << 20,
                             _pass2_footprint(bblk, tile_n, n_pad, o_pad) + (8 << 20))))

    flops1 = 2 * B * n_pad * (n_pad * f_pad + f_pad * o_pad + o_pad * o_pad)
    bytes1 = (B * (n_pad * n_pad + n_pad * f_pad + n_pad * o_pad) * 2
              + (f_pad * o_pad + o_pad * o_pad) * 2 + o_pad * 4)

    hw = pl.pallas_call(
        _gcnn_pass1_kernel,
        out_shape=jax.ShapeDtypeStruct((B, n_pad, o_pad), cdt),
        grid_spec=pltpu.PrefetchScalarGridSpec(
            num_scalar_prefetch=0,
            grid=grid,
            in_specs=[
                pl.BlockSpec((bblk, tile_n, n_pad), lambda b, r: (b, r, 0)),   # A rows
                pl.BlockSpec((bblk, n_pad, f_pad), lambda b, r: (b, 0, 0)),    # X
                pl.BlockSpec((f_pad, o_pad), lambda b, r: (0, 0)),             # W1
                pl.BlockSpec((1, o_pad), lambda b, r: (0, 0)),                 # b1
                pl.BlockSpec((o_pad, o_pad), lambda b, r: (0, 0)),             # W2
            ],
            out_specs=pl.BlockSpec((bblk, tile_n, o_pad), lambda b, r: (b, r, 0)),
        ),
        compiler_params=pltpu.CompilerParams(dimension_semantics=dims,
                                             vmem_limit_bytes=vmem1),
        cost_estimate=pl.CostEstimate(flops=flops1, transcendentals=0,
                                      bytes_accessed=bytes1),
    )(ap, xp, w1p, b1p, w2p)

    flops2 = 2 * B * n_pad * n_pad * o_pad
    bytes2 = B * (n_pad * n_pad + 2 * n_pad * o_pad) * 2 + o_pad * 4

    out = pl.pallas_call(
        _gcnn_pass2_kernel,
        out_shape=jax.ShapeDtypeStruct((B, n_pad, o_pad), out_dtype),
        grid_spec=pltpu.PrefetchScalarGridSpec(
            num_scalar_prefetch=0,
            grid=grid,
            in_specs=[
                pl.BlockSpec((bblk, tile_n, n_pad), lambda b, r: (b, r, 0)),   # A rows
                pl.BlockSpec((bblk, n_pad, o_pad), lambda b, r: (b, 0, 0)),    # HW
                pl.BlockSpec((1, o_pad), lambda b, r: (0, 0)),                 # b2
            ],
            out_specs=pl.BlockSpec((bblk, tile_n, o_pad), lambda b, r: (b, r, 0)),
        ),
        compiler_params=pltpu.CompilerParams(dimension_semantics=dims,
                                             vmem_limit_bytes=vmem2),
        cost_estimate=pl.CostEstimate(flops=flops2, transcendentals=0,
                                      bytes_accessed=bytes2),
    )(ap, hw, b2p)

    return out[:B, :N, :O]


def gcnn_forward(x, edge_idx, edge_weights, w1, b1, w2, b2, *,
                 compute_dtype=jnp.bfloat16, out_dtype=None,
                 force_row_tiled=False, row_tile=None, vmem_budget_bytes=None):
    """x: (B, N, F), edge_idx: (B, 2, E), edge_weights: (B, E) or None,
       w1: (F, O), b1: (1, O), w2: (O, O), b2: (1, O) -> (B, N, O)."""
    B, N, F = x.shape
    O = w1.shape[1]
    out_dtype = compute_dtype if out_dtype is None else out_dtype

    n_pad = _round_up(N, LANE)
    f_pad = _round_up(F, LANE)
    o_pad = _round_up(O, LANE)

    if edge_weights is None:
        edge_weights = jnp.ones((edge_idx.shape[0], edge_idx.shape[2]), jnp.float32)

    # Normalized adjacency built straight into the padded buffer, one bf16 cast.
    ap = jax.vmap(
        lambda ei, ew: _build_norm_adj_padded(ei, ew, N, n_pad, compute_dtype)
    )(edge_idx, edge_weights)                                  # (B, Np, Np)

    xp = jnp.zeros((B, n_pad, f_pad), compute_dtype).at[:, :N, :F].set(
        x.astype(compute_dtype))
    w1p = jnp.zeros((f_pad, o_pad), compute_dtype).at[:F, :O].set(
        w1.astype(compute_dtype))
    w2p = jnp.zeros((o_pad, o_pad), compute_dtype).at[:O, :O].set(
        w2.astype(compute_dtype))
    b1p = jnp.zeros((1, o_pad), jnp.float32).at[:, :O].set(
        b1.reshape(1, O).astype(jnp.float32))
    b2p = jnp.zeros((1, o_pad), jnp.float32).at[:, :O].set(
        b2.reshape(1, O).astype(jnp.float32))

    budget = (int(vmem_budget_bytes) if vmem_budget_bytes is not None
              else int(0.70 * _vmem_capacity_bytes()))

    use_fused = (not force_row_tiled) and (
        _fused_footprint(1, n_pad, f_pad, o_pad) <= budget)

    if use_fused:
        return _forward_fused(xp, ap, w1p, b1p, w2p, b2p, B, N, O,
                              n_pad, f_pad, o_pad, out_dtype, budget)
    return _forward_row_tiled(xp, ap, w1p, b1p, w2p, b2p, B, N, O,
                              n_pad, f_pad, o_pad, out_dtype, budget, row_tile)


def reference_forward(x, adj_norm, w1, b1, w2, b2):
    h = jnp.einsum("bnm,bmf->bnf", adj_norm, x @ w1) + b1
    h = jnp.maximum(h, 0.0)
    h = jnp.einsum("bnm,bmf->bnf", adj_norm, h @ w2) + b2
    return jnp.maximum(h, 0.0)


if __name__ == "__main__":
    def glorot(k, fan_in, fan_out):
        lim = jnp.sqrt(6.0 / (fan_in + fan_out))
        return jax.random.uniform(k, (fan_in, fan_out), jnp.float32, -lim, lim)

    def make_case(key, batch, n_nodes, n_features, n_out, n_edges):
        k_x, k_src, k_off, k_w, k_w1, k_w2 = jax.random.split(key, 6)
        x = jax.random.normal(k_x, (batch, n_nodes, n_features), jnp.float32)
        src = jax.random.randint(k_src, (batch, n_edges), 0, n_nodes)
        off = jax.random.randint(k_off, (batch, n_edges), 1, n_nodes)   # no self loops
        dst = (src + off) % n_nodes
        edge_idx = jnp.stack([src, dst], axis=1).astype(jnp.int32)      # (B, 2, E)
        edge_weights = jax.random.uniform(k_w, (batch, n_edges), jnp.float32, 0.5, 1.5)
        w1 = glorot(k_w1, n_features, n_out)
        b1 = jnp.zeros((1, n_out), jnp.float32)
        w2 = glorot(k_w2, n_out, n_out)
        b2 = jnp.zeros((1, n_out), jnp.float32)
        return x, edge_idx, edge_weights, w1, b1, w2, b2

    key = jax.random.PRNGKey(0)
    k1, k2 = jax.random.split(key)

    fwd = jax.jit(gcnn_forward,
                  static_argnames=("compute_dtype", "out_dtype", "force_row_tiled",
                                   "row_tile", "vmem_budget_bytes"))

    # Case 1: small graph -> fused single-kernel path.
    x, ei, ew, w1, b1, w2, b2 = make_case(k1, batch=2, n_nodes=16,
                                          n_features=8, n_out=32, n_edges=24)
    out = jax.block_until_ready(fwd(x, ei, ew, w1, b1, w2, b2))
    adj = jax.vmap(build_norm_adj, in_axes=(0, 0, None))(ei, ew, 16)
    ref = reference_forward(x, adj, w1, b1, w2, b2)
    assert out.shape == (2, 16, 32)
    assert jnp.allclose(out.astype(jnp.float32), ref, atol=5e-2, rtol=5e-2), (
        float(jnp.max(jnp.abs(out.astype(jnp.float32) - ref))))

    # Case 2: larger graph, forced two-pass row-tiled path (v7x-style A tiling).
    x, ei, ew, w1, b1, w2, b2 = make_case(k2, batch=2, n_nodes=200,
                                          n_features=8, n_out=32, n_edges=64)
    out = jax.block_until_ready(
        fwd(x, ei, ew, w1, b1, w2, b2, force_row_tiled=True, row_tile=128))
    adj = jax.vmap(build_norm_adj, in_axes=(0, 0, None))(ei, ew, 200)
    ref = reference_forward(x, adj, w1, b1, w2, b2)
    assert out.shape == (2, 200, 32)
    assert jnp.allclose(out.astype(jnp.float32), ref, atol=5e-2, rtol=5e-2), (
        float(jnp.max(jnp.abs(out.astype(jnp.float32) - ref))))

    print("KERNEL_OK")
</pallas_src>

<mosaic_0001>
module attributes {stable_mosaic.version = 11 : i64} {
  func.func private @main(%arg0: i32) attributes {dimension_semantics = [#tpu.dimension_semantics<core_parallel>], iteration_bounds = array<i64: 2>, tpu.core_type = #tpu.core_type<sc_scalar_subcore>, window_params = []} {
    return
  }
}

module attributes {stable_mosaic.version = 11 : i64} {
  func.func private @main(%arg0: i32) attributes {dimension_semantics = [#tpu.dimension_semantics<core_parallel>], iteration_bounds = array<i64: 2>, tpu.core_type = #tpu.core_type<sc_scalar_subcore>, window_params = []} {
    return
  }
}

module attributes {stable_mosaic.version = 11 : i64} {
  func.func @_gcnn_fused_kernel(%arg0: i32, %arg1: memref<1x128x128xbf16, #tpu.memory_space<vmem>>, %arg2: memref<1x128x128xbf16, #tpu.memory_space<vmem>>, %arg3: memref<128x128xbf16, #tpu.memory_space<vmem>>, %arg4: memref<1x128xf32, #tpu.memory_space<vmem>>, %arg5: memref<128x128xbf16, #tpu.memory_space<vmem>>, %arg6: memref<1x128xf32, #tpu.memory_space<vmem>>, %arg7: memref<1x128x128xbf16, #tpu.memory_space<vmem>>) attributes {dimension_semantics = [#tpu.dimension_semantics<parallel>], iteration_bounds = array<i64: 2>, scalar_prefetch = 0 : i64, scratch_operands = 0 : i64, tpu.core_type = #tpu.core_type<tc>, window_params = [{transform_indices = @transform_0, window_bounds = array<i64: 1, 128, 128>}, {transform_indices = @transform_1, window_bounds = array<i64: 1, 128, 128>}, {pipeline_mode = #tpu.pipeline_mode<synchronous>, transform_indices = @transform_2, window_bounds = array<i64: 128, 128>}, {pipeline_mode = #tpu.pipeline_mode<synchronous>, transform_indices = @transform_3, window_bounds = array<i64: 1, 128>}, {pipeline_mode = #tpu.pipeline_mode<synchronous>, transform_indices = @transform_4, window_bounds = array<i64: 128, 128>}, {pipeline_mode = #tpu.pipeline_mode<synchronous>, transform_indices = @transform_5, window_bounds = array<i64: 1, 128>}, {transform_indices = @transform_6, window_bounds = array<i64: 1, 128, 128>}]} {
    %c0 = arith.constant 0 : index
    %c0_0 = arith.constant 0 : index
    %c0_1 = arith.constant 0 : index
    %0 = vector.load %arg2[%c0, %c0_0, %c0_1] : memref<1x128x128xbf16, #tpu.memory_space<vmem>>, vector<1x128x128xbf16>
    %c0_2 = arith.constant 0 : index
    %c0_3 = arith.constant 0 : index
    %c0_4 = arith.constant 0 : index
    %1 = vector.load %arg1[%c0_2, %c0_3, %c0_4] : memref<1x128x128xbf16, #tpu.memory_space<vmem>>, vector<1x128x128xbf16>
    "tpu.trace_start"() <{level = 10 : i32, message = "bnm,bmf->bnf"}> : () -> ()
    %cst = arith.constant dense<0.000000e+00> : vector<1x128x128xf32>
    %2 = tpu.matmul %0, %1, %cst {dimension_numbers = #tpu.dot_dimension_numbers<[2], [1], [1], [2], [0, 0, 0, 1, 1, 2], [0], [0]>} : vector<1x128x128xbf16>, vector<1x128x128xbf16>, vector<1x128x128xf32> -> vector<1x128x128xf32>
    "tpu.trace_stop"() : () -> ()
    %3 = arith.truncf %2 : vector<1x128x128xf32> to vector<1x128x128xbf16>
    %c0_5 = arith.constant 0 : index
    %c0_6 = arith.constant 0 : index
    %4 = vector.load %arg3[%c0_5, %c0_6] : memref<128x128xbf16, #tpu.memory_space<vmem>>, vector<128x128xbf16>
    "tpu.trace_start"() <{level = 10 : i32, message = "bnf,fo->bno"}> : () -> ()
    %cst_7 = arith.constant dense<0.000000e+00> : vector<1x128x128xf32>
    %5 = tpu.matmul %3, %4, %cst_7 {dimension_numbers = #tpu.dot_dimension_numbers<[2], [0], [0, 1], [1], [0, 0, 0, 1, 1, 1], [], []>} : vector<1x128x128xbf16>, vector<128x128xbf16>, vector<1x128x128xf32> -> vector<1x128x128xf32>
    "tpu.trace_stop"() : () -> ()
    %c0_8 = arith.constant 0 : index
    %c0_9 = arith.constant 0 : index
    %6 = vector.load %arg4[%c0_8, %c0_9] : memref<1x128xf32, #tpu.memory_space<vmem>>, vector<1x128xf32>
    %7 = vector.shape_cast %6 : vector<1x128xf32> to vector<1x1x128xf32>
    %8 = vector.broadcast %7 : vector<1x1x128xf32> to vector<1x128x128xf32>
    %9 = arith.addf %5, %8 : vector<1x128x128xf32>
    %cst_10 = arith.constant 0.000000e+00 : f32
    %10 = vector.broadcast %cst_10 : f32 to vector<1x128x128xf32>
    %11 = arith.maximumf %9, %10 : vector<1x128x128xf32>
    %12 = arith.truncf %11 : vector<1x128x128xf32> to vector<1x128x128xbf16>
    %c0_11 = arith.constant 0 : index
    %c0_12 = arith.constant 0 : index
    %13 = vector.load %arg5[%c0_11, %c0_12] : memref<128x128xbf16, #tpu.memory_space<vmem>>, vector<128x128xbf16>
    "tpu.trace_start"() <{level = 10 : i32, message = "bno,op->bnp"}> : () -> ()
    %cst_13 = arith.constant dense<0.000000e+00> : vector<1x128x128xf32>
    %14 = tpu.matmul %12, %13, %cst_13 {dimension_numbers = #tpu.dot_dimension_numbers<[2], [0], [0, 1], [1], [0, 0, 0, 1, 1, 1], [], []>} : vector<1x128x128xbf16>, vector<128x128xbf16>, vector<1x128x128xf32> -> vector<1x128x128xf32>
    "tpu.trace_stop"() : () -> ()
    %15 = arith.truncf %14 : vector<1x128x128xf32> to vector<1x128x128xbf16>
    "tpu.trace_start"() <{level = 10 : i32, message = "bnm,bmp->bnp"}> : () -> ()
    %cst_14 = arith.constant dense<0.000000e+00> : vector<1x128x128xf32>
    %16 = tpu.matmul %0, %15, %cst_14 {dimension_numbers = #tpu.dot_dimension_numbers<[2], [1], [1], [2], [0, 0, 0, 1, 1, 2], [0], [0]>} : vector<1x128x128xbf16>, vector<1x128x128xbf16>, vector<1x128x128xf32> -> vector<1x128x128xf32>
    "tpu.trace_stop"() : () -> ()
    %c0_15 = arith.constant 0 : index
    %c0_16 = arith.constant 0 : index
    %17 = vector.load %arg6[%c0_15, %c0_16] : memref<1x128xf32, #tpu.memory_space<vmem>>, vector<1x128xf32>
    %18 = vector.shape_cast %17 : vector<1x128xf32> to vector<1x1x128xf32>
    %19 = vector.broadcast %18 : vector<1x1x128xf32> to vector<1x128x128xf32>
    %20 = arith.addf %16, %19 : vector<1x128x128xf32>
    %cst_17 = arith.constant 0.000000e+00 : f32
    %21 = vector.broadcast %cst_17 : f32 to vector<1x128x128xf32>
    %22 = arith.maximumf %20, %21 : vector<1x128x128xf32>
    %23 = arith.truncf %22 : vector<1x128x128xf32> to vector<1x128x128xbf16>
    %c0_18 = arith.constant 0 : index
    %c0_19 = arith.constant 0 : index
    %c0_20 = arith.constant 0 : index
    %24 = vector.load %arg7[%c0_18, %c0_19, %c0_20] : memref<1x128x128xbf16, #tpu.memory_space<vmem>>, vector<1x128x128xbf16>
    tpu.vector_store %arg7[%c0_18, %c0_19, %c0_20], %23 {strides = array<i32>} : memref<1x128x128xbf16, #tpu.memory_space<vmem>>, vector<1x128x128xbf16>,
    return
  }
  func.func @transform_0(%arg0: i32) -> (i32, i32, i32) {
    %c0_i32 = arith.constant 0 : i32
    %c0_i32_0 = arith.constant 0 : i32
    %c0_i32_1 = arith.constant 0 : i32
    return %arg0, %c0_i32, %c0_i32_0 : i32, i32, i32
  }
  func.func @transform_1(%arg0: i32) -> (i32, i32, i32) {
    %c0_i32 = arith.constant 0 : i32
    %c0_i32_0 = arith.constant 0 : i32
    %c0_i32_1 = arith.constant 0 : i32
    return %arg0, %c0_i32, %c0_i32_0 : i32, i32, i32
  }
  func.func @transform_2(%arg0: i32) -> (i32, i32) {
    %c0_i32 = arith.constant 0 : i32
    %c0_i32_0 = arith.constant 0 : i32
    %c0_i32_1 = arith.constant 0 : i32
    return %c0_i32, %c0_i32_0 : i32, i32
  }
  func.func @transform_3(%arg0: i32) -> (i32, i32) {
    %c0_i32 = arith.constant 0 : i32
    %c0_i32_0 = arith.constant 0 : i32
    %c0_i32_1 = arith.constant 0 : i32
    return %c0_i32, %c0_i32_0 : i32, i32
  }
  func.func @transform_4(%arg0: i32) -> (i32, i32) {
    %c0_i32 = arith.constant 0 : i32
    %c0_i32_0 = arith.constant 0 : i32
    %c0_i32_1 = arith.constant 0 : i32
    return %c0_i32, %c0_i32_0 : i32, i32
  }
  func.func @transform_5(%arg0: i32) -> (i32, i32) {
    %c0_i32 = arith.constant 0 : i32
    %c0_i32_0 = arith.constant 0 : i32
    %c0_i32_1 = arith.constant 0 : i32
    return %c0_i32, %c0_i32_0 : i32, i32
  }
  func.func @transform_6(%arg0: i32) -> (i32, i32, i32) {
    %c0_i32 = arith.constant 0 : i32
    %c0_i32_0 = arith.constant 0 : i32
    %c0_i32_1 = arith.constant 0 : i32
    return %arg0, %c0_i32, %c0_i32_0 : i32, i32, i32
  }
}

</mosaic_0001>

<llo_original>
// kernel: gcnn_forward.1
$region0: #{gcnn_forward.1}
  #allocation0 [shape = 'u32[]', space=smem, size = 0x4, offset = 0x4, fixed_abs, tag = 'smem constant byte address 0x4 - core index']
  #allocation1 [shape = 'u32[144,128]{1,0:T(1,128)}', space=vmem, size = 0x12000, scoped, tag = 'internal scratch']
  %s0 = inlined_call_operand.vmem [shape: bf16[2,128,128], index: 0, kind: input, shape index: {}]
  %s1 = inlined_call_operand.vmem [shape: bf16[2,128,128], index: 1, kind: input, shape index: {}]
  %s2 = inlined_call_operand.vmem [shape: bf16[128,128], index: 2, kind: input, shape index: {}]
  %s3 = inlined_call_operand.vmem [shape: f32[1,128], index: 3, kind: input, shape index: {}]
  %s4 = inlined_call_operand.vmem [shape: bf16[128,128], index: 4, kind: input, shape index: {}]
  %s5 = inlined_call_operand.vmem [shape: f32[1,128], index: 5, kind: input, shape index: {}]
  %s6 = inlined_call_operand.vmem [shape: bf16[2,128,128], index: 6, kind: output, shape index: {}]
  %s7 = sld [smem:[#allocation0]]
  $region57: #{gcnn_forward.1} parent=0
    _
  %s9 = ssub.s32 1, %s7
  %s10 = scalar_select 0, %s9, %s7
  loop: start=0, step=1, limit=4
  $region2: #{gcnn_forward.1} parent=0 // loop_pre_header
    _
  $region3: #{gcnn_forward.1} parent=0 // loop_header
    %s12 = sphi 0, %s16
    %p13 = scmp.ge.s32.totalorder %s12, 4
    %s22 = sphi 0, %s24
    %s25 = sphi 0, %s22
    %s26 = sphi 0, %s25
    %s42 = sphi 0, %s26
    %s48 = sphi 0, %s50
    %s51 = sphi 0, %s48
    %s52 = sphi 0, %s51
    %s68 = sphi 0, %s52
    %s72 = sphi 0, %s72
    %s74 = sphi 0, %s72
    %s75 = sphi 0, %s74
    %s89 = sphi 0, %s75
    %s93 = sphi 0, %s93
    %s95 = sphi 0, %s93
    %s96 = sphi 0, %s95
    %s110 = sphi 0, %s96
    %s114 = sphi 0, %s114
    %s116 = sphi 0, %s114
    %s117 = sphi 0, %s116
    %s131 = sphi 0, %s117
    %s135 = sphi 0, %s135
    %s137 = sphi 0, %s135
    %s138 = sphi 0, %s137
    %s152 = sphi 0, %s138
    %s158 = sphi 0, %s160
    %s161 = sphi 0, %s158
    %s162 = sphi 0, %s161
    %s178 = sphi 0, %s162
  $region4: #{gcnn_forward.1} parent=0 // loop_header_branch
    %15 = sbr.rel (%p13) target = $region8
  $region5: #{gcnn_forward.1} parent=0 // loop_body
    %s17 = ssub.s32 %s12, 1
    %s18 = ssub.s32 %s12, 2
    %s19 = sadd.s32 %s12, 1
    %s20 = ssub.s32 %s12, %s19
    %p21 = scmp.eq.s32.totalorder %s20, 0
    %s23 = sadd.s32 %s22, 1
    %s24 = scalar_select %p21, %s22, %s23
    %p27 = pneg %p21
    %p28 = scmp.eq.s32.totalorder %s12, 1
    %p29 = por %p27, %p28
    %p30 = scmp.ne.s32.totalorder %s22, %s25
    %p31 = scmp.eq.s32.totalorder %s12, 0
    %p32 = por %p30, %p31
    %p33 = scmp.ne.s32.totalorder %s22, %s25
    %p34 = scmp.eq.s32.totalorder %s17, 1
    %p35 = por %p33, %p34
    %p36 = scmp.ne.s32.totalorder %s25, %s26
    %p37 = scmp.eq.s32.totalorder %s17, 0
    %p38 = por %p36, %p37
    %p39 = scmp.ne.s32.totalorder %s25, %s26
    %p40 = scmp.eq.s32.totalorder %s18, 1
    %p41 = por %p39, %p40
    %p43 = scmp.ne.s32.totalorder %s26, %s42
    %p44 = scmp.eq.s32.totalorder %s18, 0
    %p45 = por %p43, %p44
    %s46 = ssub.s32 %s12, %s19
    %p47 = scmp.eq.s32.totalorder %s46, 0
    %s49 = sadd.s32 %s48, 1
    %s50 = scalar_select %p47, %s48, %s49
    %p53 = pneg %p47
    %p54 = scmp.eq.s32.totalorder %s12, 1
    %p55 = por %p53, %p54
    %p56 = scmp.ne.s32.totalorder %s48, %s51
    %p57 = scmp.eq.s32.totalorder %s12, 0
    %p58 = por %p56, %p57
    %p59 = scmp.ne.s32.totalorder %s48, %s51
    %p60 = scmp.eq.s32.totalorder %s17, 1
    %p61 = por %p59, %p60
    %p62 = scmp.ne.s32.totalorder %s51, %s52
    %p63 = scmp.eq.s32.totalorder %s17, 0
    %p64 = por %p62, %p63
    %p65 = scmp.ne.s32.totalorder %s51, %s52
    %p66 = scmp.eq.s32.totalorder %s18, 1
    %p67 = por %p65, %p66
    %p69 = scmp.ne.s32.totalorder %s52, %s68
    %p70 = scmp.eq.s32.totalorder %s18, 0
    %p71 = por %p69, %p70
    %s73 = sadd.s32 %s72, 1
    %p76 = scmp.eq.s32.totalorder %s12, 1
    %p77 = scmp.ne.s32.totalorder %s72, %s74
    %p78 = scmp.eq.s32.totalorder %s12, 0
    %p79 = por %p77, %p78
    %p80 = scmp.ne.s32.totalorder %s72, %s74
    %p81 = scmp.eq.s32.totalorder %s17, 1
    %p82 = por %p80, %p81
    %p83 = scmp.ne.s32.totalorder %s74, %s75
    %p84 = scmp.eq.s32.totalorder %s17, 0
    %p85 = por %p83, %p84
    %p86 = scmp.ne.s32.totalorder %s74, %s75
    %p87 = scmp.eq.s32.totalorder %s18, 1
    %p88 = por %p86, %p87
    %p90 = scmp.ne.s32.totalorder %s75, %s89
    %p91 = scmp.eq.s32.totalorder %s18, 0
    %p92 = por %p90, %p91
    %s94 = sadd.s32 %s93, 1
    %p97 = scmp.eq.s32.totalorder %s12, 1
    %p98 = scmp.ne.s32.totalorder %s93, %s95
    %p99 = scmp.eq.s32.totalorder %s12, 0
    %p100 = por %p98, %p99
    %p101 = scmp.ne.s32.totalorder %s93, %s95
    %p102 = scmp.eq.s32.totalorder %s17, 1
    %p103 = por %p101, %p102
    %p104 = scmp.ne.s32.totalorder %s95, %s96
    %p105 = scmp.eq.s32.totalorder %s17, 0
    %p106 = por %p104, %p105
    %p107 = scmp.ne.s32.totalorder %s95, %s96
    %p108 = scmp.eq.s32.totalorder %s18, 1
    %p109 = por %p107, %p108
    %p111 = scmp.ne.s32.totalorder %s96, %s110
    %p112 = scmp.eq.s32.totalorder %s18, 0
    %p113 = por %p111, %p112
    %s115 = sadd.s32 %s114, 1
    %p118 = scmp.eq.s32.totalorder %s12, 1
    %p119 = scmp.ne.s32.totalorder %s114, %s116
    %p120 = scmp.eq.s32.totalorder %s12, 0
    %p121 = por %p119, %p120
    %p122 = scmp.ne.s32.totalorder %s114, %s116
    %p123 = scmp.eq.s32.totalorder %s17, 1
    %p124 = por %p122, %p123
    %p125 = scmp.ne.s32.totalorder %s116, %s117
    %p126 = scmp.eq.s32.totalorder %s17, 0
    %p127 = por %p125, %p126
    %p128 = scmp.ne.s32.totalorder %s116, %s117
    %p129 = scmp.eq.s32.totalorder %s18, 1
    %p130 = por %p128, %p129
    %p132 = scmp.ne.s32.totalorder %s117, %s131
    %p133 = scmp.eq.s32.totalorder %s18, 0
    %p134 = por %p132, %p133
    %s136 = sadd.s32 %s135, 1
    %p139 = scmp.eq.s32.totalorder %s12, 1
    %p140 = scmp.ne.s32.totalorder %s135, %s137
    %p141 = scmp.eq.s32.totalorder %s12, 0
    %p142 = por %p140, %p141
    %p143 = scmp.ne.s32.totalorder %s135, %s137
    %p144 = scmp.eq.s32.totalorder %s17, 1
    %p145 = por %p143, %p144
    %p146 = scmp.ne.s32.totalorder %s137, %s138
    %p147 = scmp.eq.s32.totalorder %s17, 0
    %p148 = por %p146, %p147
    %p149 = scmp.ne.s32.totalorder %s137, %s138
    %p150 = scmp.eq.s32.totalorder %s18, 1
    %p151 = por %p149, %p150
    %p153 = scmp.ne.s32.totalorder %s138, %s152
    %p154 = scmp.eq.s32.totalorder %s18, 0
    %p155 = por %p153, %p154
    %s156 = ssub.s32 %s12, %s19
    %p157 = scmp.eq.s32.totalorder %s156, 0
    %s159 = sadd.s32 %s158, 1
    %s160 = scalar_select %p157, %s158, %s159
    %p163 = pneg %p157
    %p164 = scmp.eq.s32.totalorder %s12, 1
    %p165 = por %p163, %p164
    %p166 = scmp.ne.s32.totalorder %s158, %s161
    %p167 = scmp.eq.s32.totalorder %s12, 0
    %p168 = por %p166, %p167
    %p169 = scmp.ne.s32.totalorder %s158, %s161
    %p170 = scmp.eq.s32.totalorder %s17, 1
    %p171 = por %p169, %p170
    %p172 = scmp.ne.s32.totalorder %s161, %s162
    %p173 = scmp.eq.s32.totalorder %s17, 0
    %p174 = por %p172, %p173
    %p175 = scmp.ne.s32.totalorder %s161, %s162
    %p176 = scmp.eq.s32.totalorder %s18, 1
    %p177 = por %p175, %p176
    %p179 = scmp.ne.s32.totalorder %s162, %s178
    %p180 = scmp.eq.s32.totalorder %s18, 0
    %p181 = por %p179, %p180
    %p182 = scmp.le.s32.totalorder 1, %s12
    %p183 = scmp.lt.s32.totalorder %s12, 3
    %p184 = pnand %p182, %p183
    %p185 = pneg %p184
    // Predicated region
    $region9: #{gcnn_forward.1} parent=5 // pred_check
      _
    $region10: #{gcnn_forward.1} parent=5 // pred_check_branch
      %187 = sbr.rel (%p184) target = $region12
    $region11: #{gcnn_forward.1} parent=5 // pred_region
      %s188 = ssub.s32 %s12, 1
      // Predicated region
      $region13: #{gcnn_forward.1} parent=11 // pred_check
        %p189 = pneg %p85
      $region14: #{gcnn_forward.1} parent=11 // pred_check_branch
        %191 = sbr.rel (%p189) target = $region16
      $region15: #{gcnn_forward.1} parent=11 // pred_region
        _
      $region16: #{gcnn_forward.1} parent=11 // pred_fallthru
        _
      // Predicated region
      $region17: #{gcnn_forward.1} parent=11 // pred_check
        %p192 = pneg %p106
      $region18: #{gcnn_forward.1} parent=11 // pred_check_branch
        %194 = sbr.rel (%p192) target = $region20
      $region19: #{gcnn_forward.1} parent=11 // pred_region
        _
      $region20: #{gcnn_forward.1} parent=11 // pred_fallthru
        _
      // Predicated region
      $region21: #{gcnn_forward.1} parent=11 // pred_check
        %p195 = pneg %p127
      $region22: #{gcnn_forward.1} parent=11 // pred_check_branch
        %197 = sbr.rel (%p195) target = $region24
      $region23: #{gcnn_forward.1} parent=11 // pred_region
        _
      $region24: #{gcnn_forward.1} parent=11 // pred_fallthru
        _
      // Predicated region
      $region25: #{gcnn_forward.1} parent=11 // pred_check
        %p198 = pneg %p148
      $region26: #{gcnn_forward.1} parent=11 // pred_check_branch
        %200 = sbr.rel (%p198) target = $region28
      $region27: #{gcnn_forward.1} parent=11 // pred_region
        _
      $region28: #{gcnn_forward.1} parent=11 // pred_fallthru
        _
    $region12: #{gcnn_forward.1} parent=5 // pred_fallthru
      _
    %p201 = scmp.lt.s32.totalorder %s12, 2
    // Predicated region
    $region29: #{gcnn_forward.1} parent=5 // pred_check
      %p202 = pneg %p201
    $region30: #{gcnn_forward.1} parent=5 // pred_check_branch
      %204 = sbr.rel (%p202) target = $region32
    $region31: #{gcnn_forward.1} parent=5 // pred_region
      // Predicated region
      $region33: #{gcnn_forward.1} parent=31 // pred_check
        %p205 = pneg %p32
      $region34: #{gcnn_forward.1} parent=31 // pred_check_branch
        %207 = sbr.rel (%p205) target = $region36
      $region35: #{gcnn_forward.1} parent=31 // pred_region
        %p208 = scmp.lt.s32.totalorder %s12, 1
        %s209 = scalar_select %p208, %s12, 1
        %s210 = smul.addr %s209, 16
        %s211 = smul.addr %s210, 4
        %s212 = scalar_lea.vmem %s0, %s211
      $region36: #{gcnn_forward.1} parent=31 // pred_fallthru
        _
      // Predicated region
      $region37: #{gcnn_forward.1} parent=31 // pred_check
        %p213 = pneg %p58
      $region38: #{gcnn_forward.1} parent=31 // pred_check_branch
        %215 = sbr.rel (%p213) target = $region40
      $region39: #{gcnn_forward.1} parent=31 // pred_region
        %p216 = scmp.lt.s32.totalorder %s12, 1
        %s217 = scalar_select %p216, %s12, 1
        %s218 = smul.addr %s217, 16
        %s219 = smul.addr %s218, 4
        %s220 = scalar_lea.vmem %s1, %s219
      $region40: #{gcnn_forward.1} parent=31 // pred_fallthru
        _
    $region32: #{gcnn_forward.1} parent=5 // pred_fallthru
      _
    %p221 = scmp.le.s32.totalorder 1, %s12
    %p222 = scmp.lt.s32.totalorder %s12, 3
    %p223 = pnand %p221, %p222
    %p224 = pneg %p223
    // Predicated region
    $region41: #{gcnn_forward.1} parent=5 // pred_check
      _
    $region42: #{gcnn_forward.1} parent=5 // pred_check_branch
      %226 = sbr.rel (%p223) target = $region44
    $region43: #{gcnn_forward.1} parent=5 // pred_region
      %s227 = ssub.s32 %s12, 1
      %p228 = scmp.lt.s32.totalorder %s17, 1
      %s229 = scalar_select %p228, %s17, 1
      %s230 = smul.addr %s229, 16
      %s231 = smul.addr %s230, 4
      %s232 = scalar_lea.vmem %s0, %s231
      %p233 = pneg %p38
      %p234 = pneg %p35
      %p235 = scmp.lt.s32.totalorder %s17, 1
      %s236 = scalar_select %p235, %s17, 1
      %s237 = smul.addr %s236, 16
      %s238 = smul.addr %s237, 4
      %s239 = scalar_lea.vmem %s1, %s238
      %p240 = pneg %p64
      %p241 = pneg %p61
      %p242 = pneg %p85
      %p243 = pneg %p82
      %p244 = pneg %p106
      %p245 = pneg %p103
      %p246 = pneg %p127
      %p247 = pneg %p124
      %p248 = pneg %p148
      %p249 = pneg %p145
      %p250 = pneg %p174
      %p251 = pneg %p171
      %p252 = scmp.lt.s32.totalorder %s17, 1
      %s253 = scalar_select %p252, %s17, 1
      %s254 = smul.addr %s253, 16
      %s255 = smul.addr %s254, 4
      %s256 = scalar_lea.vmem %s6, %s255
      %p257 = scmp.lt.s32.totalorder %s17, 1
      %s258 = scalar_select %p257, %s17, 1
      %s259 = smul.addr %s258, 16
      %s260 = smul.addr %s259, 4
      %s261 = scalar_lea.vmem %s0, %s260
      %p262 = scmp.lt.s32.totalorder %s17, 1
      %s263 = scalar_select %p262, %s17, 1
      %s264 = smul.addr %s263, 16
      %s265 = smul.addr %s264, 4
      %s266 = scalar_lea.vmem %s1, %s265
      %p267 = scmp.lt.s32.totalorder %s17, 1
      %s268 = scalar_select %p267, %s17, 1
      %s269 = smul.addr %s268, 16
      %s270 = smul.addr %s269, 4
      %s271 = scalar_lea.vmem %s6, %s270
      %v273 = vld [vmem:[%s266] sm:$0xf]
      %v274 = vld [vmem:[%s266 + $0x4] sm:$0xf]
      %v275 = vld [vmem:[%s266 + $0x8] sm:$0xf]
      %v276 = vld [vmem:[%s266 + $0xc] sm:$0xf]
      %v277 = vld [vmem:[%s266 + $0x10] sm:$0xf]
      %v278 = vld [vmem:[%s266 + $0x14] sm:$0xf]
      %v279 = vld [vmem:[%s266 + $0x18] sm:$0xf]
      %v280 = vld [vmem:[%s266 + $0x1c] sm:$0xf]
      %v281 = vld [vmem:[%s266 + $0x20] sm:$0xf]
      %v282 = vld [vmem:[%s266 + $0x24] sm:$0xf]
      %v283 = vld [vmem:[%s266 + $0x28] sm:$0xf]
      %v284 = vld [vmem:[%s266 + $0x2c] sm:$0xf]
      %v285 = vld [vmem:[%s266 + $0x30] sm:$0xf]
      %v286 = vld [vmem:[%s266 + $0x34] sm:$0xf]
      %v287 = vld [vmem:[%s266 + $0x38] sm:$0xf]
      %v288 = vld [vmem:[%s266 + $0x3c] sm:$0xf]
      %v289 = vld [vmem:[%s261] sm:$0xf]
      %v290 = vld [vmem:[%s261 + $0x4] sm:$0xf]
      %v291 = vld [vmem:[%s261 + $0x8] sm:$0xf]
      %v292 = vld [vmem:[%s261 + $0xc] sm:$0xf]
      %v293 = vld [vmem:[%s261 + $0x10] sm:$0xf]
      %v294 = vld [vmem:[%s261 + $0x14] sm:$0xf]
      %v295 = vld [vmem:[%s261 + $0x18] sm:$0xf]
      %v296 = vld [vmem:[%s261 + $0x1c] sm:$0xf]
      %v297 = vld [vmem:[%s261 + $0x20] sm:$0xf]
      %v298 = vld [vmem:[%s261 + $0x24] sm:$0xf]
      %v299 = vld [vmem:[%s261 + $0x28] sm:$0xf]
      %v300 = vld [vmem:[%s261 + $0x2c] sm:$0xf]
      %v301 = vld [vmem:[%s261 + $0x30] sm:$0xf]
      %v302 = vld [vmem:[%s261 + $0x34] sm:$0xf]
      %v303 = vld [vmem:[%s261 + $0x38] sm:$0xf]
      %v304 = vld [vmem:[%s261 + $0x3c] sm:$0xf]
      %v321 = vunpack.c.l.b16 %v273
      %v322 = vunpack.c.l.b16 %v274
      %v323 = vunpack.c.l.b16 %v275
      %v324 = vunpack.c.l.b16 %v276
      %v325 = vunpack.c.l.b16 %v277
      %v326 = vunpack.c.l.b16 %v278
      %v327 = vunpack.c.l.b16 %v279
      %v328 = vunpack.c.l.b16 %v280
      %v329 = vunpack.c.l.b16 %v281
      %v330 = vunpack.c.l.b16 %v282
      %v331 = vunpack.c.l.b16 %v283
      %v332 = vunpack.c.l.b16 %v284
      %v333 = vunpack.c.l.b16 %v285
      %v334 = vunpack.c.l.b16 %v286
      %v335 = vunpack.c.l.b16 %v287
      %v336 = vunpack.c.l.b16 %v288
      %v337 = vpack.c.b16 %v322, %v321
      %v338 = vpack.c.b16 %v324, %v323
      %v339 = vpack.c.b16 %v326, %v325
      %v340 = vpack.c.b16 %v328, %v327
      %v341 = vpack.c.b16 %v330, %v329
      %v342 = vpack.c.b16 %v332, %v331
      %v343 = vpack.c.b16 %v334, %v333
      %v344 = vpack.c.b16 %v336, %v335
      %v369 = vunpack.c.l.b16 %v289
      %v370 = vunpack.c.l.b16 %v290
      %v371 = vunpack.c.l.b16 %v291
      %v372 = vunpack.c.l.b16 %v292
      %v373 = vunpack.c.l.b16 %v293
      %v374 = vunpack.c.l.b16 %v294
      %v375 = vunpack.c.l.b16 %v295
      %v376 = vunpack.c.l.b16 %v296
      %v377 = vunpack.c.l.b16 %v297
      %v378 = vunpack.c.l.b16 %v298
      %v379 = vunpack.c.l.b16 %v299
      %v380 = vunpack.c.l.b16 %v300
      %v381 = vunpack.c.l.b16 %v301
      %v382 = vunpack.c.l.b16 %v302
      %v383 = vunpack.c.l.b16 %v303
      %v384 = vunpack.c.l.b16 %v304
      %v385 = vpack.c.b16 %v370, %v369
      %v386 = vpack.c.b16 %v372, %v371
      %v387 = vpack.c.b16 %v374, %v373
      %v388 = vpack.c.b16 %v376, %v375
      %v389 = vpack.c.b16 %v378, %v377
      %v390 = vpack.c.b16 %v380, %v379
      %v391 = vpack.c.b16 %v382, %v381
      %v392 = vpack.c.b16 %v384, %v383
      %401 = vmatprep.subr.bf16.mxu0 0
      %402 = vmatpush1.bf16.msra.mxu0 %v385
      %403 = vmatprep.subr.bf16.mxu0 0
      %404 = vmatpush1.bf16.msra.mxu0 %v386
      %405 = vmatprep.subr.bf16.mxu0 0
      %406 = vmatpush1.bf16.msra.mxu0 %v387
      %407 = vmatprep.subr.bf16.mxu0 0
      %408 = vmatpush1.bf16.msra.mxu0 %v388
      %409 = vmatprep.subr.bf16.mxu0 0
      %410 = vmatpush1.bf16.msra.mxu0 %v389
      %411 = vmatprep.subr.bf16.mxu0 0
      %412 = vmatpush1.bf16.msra.mxu0 %v390
      %413 = vmatprep.subr.bf16.mxu0 0
      %414 = vmatpush1.bf16.msra.mxu0 %v391
      %415 = vmatprep.subr.bf16.mxu0 0
      %416 = vmatpush1.bf16.msra.mxu0 %v392
      %417 = vmatprep.subr.bf16.mxu0 0
      %418 = vmatpush1.bf16.msra.mxu0 0
      %419 = vmatprep.subr.bf16.mxu0 0
      %420 = vmatpush1.bf16.msra.mxu0 0
      %421 = vmatprep.subr.bf16.mxu0 0
      %422 = vmatpush1.bf16.msra.mxu0 0
      %423 = vmatprep.subr.bf16.mxu0 0
      %424 = vmatpush1.bf16.msra.mxu0 0
      %425 = vmatprep.subr.bf16.mxu0 0
      %426 = vmatpush1.bf16.msra.mxu0 0
      %427 = vmatprep.subr.bf16.mxu0 0
      %428 = vmatpush1.bf16.msra.mxu0 0
      %429 = vmatprep.subr.bf16.mxu0 0
      %430 = vmatpush1.bf16.msra.mxu0 0
      %431 = vmatprep.subr.bf16.mxu0 0
      %432 = vmatpush1.bf16.msra.mxu0 0
      %433 = vmatprep.mubr.bf16.mxu0 0
      %434 = vmatmul.mubr.bf16.gmra.mrb[0].mxu0 %v337
      %v435 = vpop.f32.mrb[0].mxu0
      %v436 = vadd.f32 0.0, %v435
      %v437 = vpop.f32.mrb[0].mxu0
      %v438 = vpop.f32.mrb[0].mxu0
      %v439 = vadd.f32 0.0, %v438
      %v440 = vpop.f32.mrb[0].mxu0
      %441 = vmatprep.mubr.bf16.mxu0 0
      %442 = vmatmul.mubr.bf16.gmra.mrb[0].mxu0 %v338
      %v443 = vpop.f32.mrb[0].mxu0
      %v444 = vadd.f32 0.0, %v443
      %v445 = vpop.f32.mrb[0].mxu0
      %v446 = vpop.f32.mrb[0].mxu0
      %v447 = vadd.f32 0.0, %v446
      %v448 = vpop.f32.mrb[0].mxu0
      %449 = vmatprep.mubr.bf16.mxu0 0
      %450 = vmatmul.mubr.bf16.gmra.mrb[0].mxu0 %v339
      %v451 = vpop.f32.mrb[0].mxu0
      %v452 = vadd.f32 0.0, %v451
      %v453 = vpop.f32.mrb[0].mxu0
      %v454 = vpop.f32.mrb[0].mxu0
      %v455 = vadd.f32 0.0, %v454
      %v456 = vpop.f32.mrb[0].mxu0
      %457 = vmatprep.mubr.bf16.mxu0 0
      %458 = vmatmul.mubr.bf16.gmra.mrb[0].mxu0 %v340
      %v459 = vpop.f32.mrb[0].mxu0
      %v460 = vadd.f32 0.0, %v459
      %v461 = vpop.f32.mrb[0].mxu0
      %v462 = vpop.f32.mrb[0].mxu0
      %v463 = vadd.f32 0.0, %v462
      %v464 = vpop.f32.mrb[0].mxu0
      %465 = vmatprep.mubr.bf16.mxu0 0
      %466 = vmatmul.mubr.bf16.gmra.mrb[0].mxu0 %v341
      %v467 = vpop.f32.mrb[0].mxu0
      %v468 = vadd.f32 0.0, %v467
      %v469 = vpop.f32.mrb[0].mxu0
      %v470 = vpop.f32.mrb[0].mxu0
      %v471 = vadd.f32 0.0, %v470
      %v472 = vpop.f32.mrb[0].mxu0
      %473 = vmatprep.mubr.bf16.mxu0 0
      %474 = vmatmul.mubr.bf16.gmra.mrb[0].mxu0 %v342
      %v475 = vpop.f32.mrb[0].mxu0
      %v476 = vadd.f32 0.0, %v475
      %v477 = vpop.f32.mrb[0].mxu0
      %v478 = vpop.f32.mrb[0].mxu0
      %v479 = vadd.f32 0.0, %v478
      %v480 = vpop.f32.mrb[0].mxu0
      %481 = vmatprep.mubr.bf16.mxu0 0
      %482 = vmatmul.mubr.bf16.gmra.mrb[0].mxu0 %v343
      %v483 = vpop.f32.mrb[0].mxu0
      %v484 = vadd.f32 0.0, %v483
      %v485 = vpop.f32.mrb[0].mxu0
      %v486 = vpop.f32.mrb[0].mxu0
      %v487 = vadd.f32 0.0, %v486
      %v488 = vpop.f32.mrb[0].mxu0
      %489 = vmatprep.mubr.bf16.mxu0 0
      %490 = vmatmul.mubr.bf16.gmra.mrb[0].mxu0 %v344
      %v491 = vpop.f32.mrb[0].mxu0
      %v492 = vadd.f32 0.0, %v491
      %v493 = vpop.f32.mrb[0].mxu0
      %v494 = vpop.f32.mrb[0].mxu0
      %v495 = vadd.f32 0.0, %v494
      %v496 = vpop.f32.mrb[0].mxu0
      %497 = vdwg.mxu0
      %v498 = vpack.c.bf16 %v439, %v436
      %v499 = vpack.c.bf16 %v447, %v444
      %v500 = vpack.c.bf16 %v455, %v452
      %v501 = vpack.c.bf16 %v463, %v460
      %v502 = vpack.c.bf16 %v471, %v468
      %v503 = vpack.c.bf16 %v479, %v476
      %v504 = vpack.c.bf16 %v487, %v484
      %v505 = vpack.c.bf16 %v495, %v492
      %v506 = vld [vmem:[%s2] sm:$0xf]
      %v507 = vld [vmem:[%s2 + $0x4] sm:$0xf]
      %v508 = vld [vmem:[%s2 + $0x8] sm:$0xf]
      %v509 = vld [vmem:[%s2 + $0xc] sm:$0xf]
      %v510 = vld [vmem:[%s2 + $0x10] sm:$0xf]
      %v511 = vld [vmem:[%s2 + $0x14] sm:$0xf]
      %v512 = vld [vmem:[%s2 + $0x18] sm:$0xf]
      %v513 = vld [vmem:[%s2 + $0x1c] sm:$0xf]
      %v514 = vld [vmem:[%s2 + $0x20] sm:$0xf]
      %v515 = vld [vmem:[%s2 + $0x24] sm:$0xf]
      %v516 = vld [vmem:[%s2 + $0x28] sm:$0xf]
      %v517 = vld [vmem:[%s2 + $0x2c] sm:$0xf]
      %v518 = vld [vmem:[%s2 + $0x30] sm:$0xf]
      %v519 = vld [vmem:[%s2 + $0x34] sm:$0xf]
      %v520 = vld [vmem:[%s2 + $0x38] sm:$0xf]
      %v521 = vld [vmem:[%s2 + $0x3c] sm:$0xf]
      %v522 = vld [vmem:[%s3] sm:$0x1]
      %v524 = vlaneseq
      %v525 = vshrl.u32 %v524, 7
      %v526 = vsub.s32 0, %v525
      %v527 = vrot.slane %v522, %v526
      %v545 = vunpack.c.l.b16 %v506
      %v546 = vunpack.c.l.b16 %v507
      %v547 = vunpack.c.l.b16 %v508
      %v548 = vunpack.c.l.b16 %v509
      %v549 = vunpack.c.l.b16 %v510
      %v550 = vunpack.c.l.b16 %v511
      %v551 = vunpack.c.l.b16 %v512
      %v552 = vunpack.c.l.b16 %v513
      %v553 = vunpack.c.l.b16 %v514
      %v554 = vunpack.c.l.b16 %v515
      %v555 = vunpack.c.l.b16 %v516
      %v556 = vunpack.c.l.b16 %v517
      %v557 = vunpack.c.l.b16 %v518
      %v558 = vunpack.c.l.b16 %v519
      %v559 = vunpack.c.l.b16 %v520
      %v560 = vunpack.c.l.b16 %v521
      %v561 = vpack.c.b16 %v546, %v545
      %v562 = vpack.c.b16 %v548, %v547
      %v563 = vpack.c.b16 %v550, %v549
      %v564 = vpack.c.b16 %v552, %v551
      %v565 = vpack.c.b16 %v554, %v553
      %v566 = vpack.c.b16 %v556, %v555
      %v567 = vpack.c.b16 %v558, %v557
      %v568 = vpack.c.b16 %v560, %v559
      %577 = vmatprep.subr.bf16.mxu0 0
      %578 = vmatpush1.bf16.msra.mxu0 %v561
      %579 = vmatprep.subr.bf16.mxu0 0
      %580 = vmatpush1.bf16.msra.mxu0 %v562
      %581 = vmatprep.subr.bf16.mxu0 0
      %582 = vmatpush1.bf16.msra.mxu0 %v563
      %583 = vmatprep.subr.bf16.mxu0 0
      %584 = vmatpush1.bf16.msra.mxu0 %v564
      %585 = vmatprep.subr.bf16.mxu0 0
      %586 = vmatpush1.bf16.msra.mxu0 %v565
      %587 = vmatprep.subr.bf16.mxu0 0
      %588 = vmatpush1.bf16.msra.mxu0 %v566
      %589 = vmatprep.subr.bf16.mxu0 0
      %590 = vmatpush1.bf16.msra.mxu0 %v567
      %591 = vmatprep.subr.bf16.mxu0 0
      %592 = vmatpush1.bf16.msra.mxu0 %v568
      %593 = vmatprep.subr.bf16.mxu0 0
      %594 = vmatpush1.bf16.msra.mxu0 0
      %595 = vmatprep.subr.bf16.mxu0 0
      %596 = vmatpush1.bf16.msra.mxu0 0
      %597 = vmatprep.subr.bf16.mxu0 0
      %598 = vmatpush1.bf16.msra.mxu0 0
      %599 = vmatprep.subr.bf16.mxu0 0
      %600 = vmatpush1.bf16.msra.mxu0 0
      %601 = vmatprep.subr.bf16.mxu0 0
      %602 = vmatpush1.bf16.msra.mxu0 0
      %603 = vmatprep.subr.bf16.mxu0 0
      %604 = vmatpush1.bf16.msra.mxu0 0
      %605 = vmatprep.subr.bf16.mxu0 0
      %606 = vmatpush1.bf16.msra.mxu0 0
      %607 = vmatprep.subr.bf16.mxu0 0
      %608 = vmatpush1.bf16.msra.mxu0 0
      %609 = vmatprep.mubr.bf16.mxu0 0
      %610 = vmatmul.mubr.bf16.gmra.mrb[0].mxu0 %v498
      %v611 = vpop.f32.mrb[0].mxu0
      %v612 = vadd.f32 %v527, %v611
      %v613 = vpop.f32.mrb[0].mxu0
      %v614 = vpop.f32.mrb[0].mxu0
      %v615 = vadd.f32 %v527, %v614
      %v616 = vpop.f32.mrb[0].mxu0
      %617 = vmatprep.mubr.bf16.mxu0 0
      %618 = vmatmul.mubr.bf16.gmra.mrb[0].mxu0 %v499
      %v619 = vpop.f32.mrb[0].mxu0
      %v620 = vadd.f32 %v527, %v619
      %v621 = vpop.f32.mrb[0].mxu0
      %v622 = vpop.f32.mrb[0].mxu0
      %v623 = vadd.f32 %v527, %v622
      %v624 = vpop.f32.mrb[0].mxu0
      %625 = vmatprep.mubr.bf16.mxu0 0
      %626 = vmatmul.mubr.bf16.gmra.mrb[0].mxu0 %v500
      %v627 = vpop.f32.mrb[0].mxu0
      %v628 = vadd.f32 %v527, %v627
      %v629 = vpop.f32.mrb[0].mxu0
      %v630 = vpop.f32.mrb[0].mxu0
      %v631 = vadd.f32 %v527, %v630
      %v632 = vpop.f32.mrb[0].mxu0
      %633 = vmatprep.mubr.bf16.mxu0 0
      %634 = vmatmul.mubr.bf16.gmra.mrb[0].mxu0 %v501
      %v635 = vpop.f32.mrb[0].mxu0
      %v636 = vadd.f32 %v527, %v635
      %v637 = vpop.f32.mrb[0].mxu0
      %v638 = vpop.f32.mrb[0].mxu0
      %v639 = vadd.f32 %v527, %v638
      %v640 = vpop.f32.mrb[0].mxu0
      %641 = vmatprep.mubr.bf16.mxu0 0
      %642 = vmatmul.mubr.bf16.gmra.mrb[0].mxu0 %v502
      %v643 = vpop.f32.mrb[0].mxu0
      %v644 = vadd.f32 %v527, %v643
      %v645 = vpop.f32.mrb[0].mxu0
      %v646 = vpop.f32.mrb[0].mxu0
      %v647 = vadd.f32 %v527, %v646
      %v648 = vpop.f32.mrb[0].mxu0
      %649 = vmatprep.mubr.bf16.mxu0 0
      %650 = vmatmul.mubr.bf16.gmra.mrb[0].mxu0 %v503
      %v651 = vpop.f32.mrb[0].mxu0
      %v652 = vadd.f32 %v527, %v651
      %v653 = vpop.f32.mrb[0].mxu0
      %v654 = vpop.f32.mrb[0].mxu0
      %v655 = vadd.f32 %v527, %v654
      %v656 = vpop.f32.mrb[0].mxu0
      %657 = vmatprep.mubr.bf16.mxu0 0
      %658 = vmatmul.mubr.bf16.gmra.mrb[0].mxu0 %v504
      %v659 = vpop.f32.mrb[0].mxu0
      %v660 = vadd.f32 %v527, %v659
      %v661 = vpop.f32.mrb[0].mxu0
      %v662 = vpop.f32.mrb[0].mxu0
      %v663 = vadd.f32 %v527, %v662
      %v664 = vpop.f32.mrb[0].mxu0
      %665 = vmatprep.mubr.bf16.mxu0 0
      %666 = vmatmul.mubr.bf16.gmra.mrb[0].mxu0 %v505
      %v667 = vpop.f32.mrb[0].mxu0
      %v668 = vadd.f32 %v527, %v667
      %v669 = vpop.f32.mrb[0].mxu0
      %v670 = vpop.f32.mrb[0].mxu0
      %v671 = vadd.f32 %v527, %v670
      %v672 = vpop.f32.mrb[0].mxu0
      %673 = vdwg.mxu0
      %v674 = vmax.f32 %v612, 0.0
      %v675 = vmax.f32 %v615, 0.0
      %v676 = vmax.f32 %v620, 0.0
      %v677 = vmax.f32 %v623, 0.0
      %v678 = vmax.f32 %v628, 0.0
      %v679 = vmax.f32 %v631, 0.0
      %v680 = vmax.f32 %v636, 0.0
      %v681 = vmax.f32 %v639, 0.0
      %v682 = vmax.f32 %v644, 0.0
      %v683 = vmax.f32 %v647, 0.0
      %v684 = vmax.f32 %v652, 0.0
      %v685 = vmax.f32 %v655, 0.0
      %v686 = vmax.f32 %v660, 0.0
      %v687 = vmax.f32 %v663, 0.0
      %v688 = vmax.f32 %v668, 0.0
      %v689 = vmax.f32 %v671, 0.0
      %v690 = vpack.c.bf16 %v675, %v674
      %v691 = vpack.c.bf16 %v677, %v676
      %v692 = vpack.c.bf16 %v679, %v678
      %v693 = vpack.c.bf16 %v681, %v680
      %v694 = vpack.c.bf16 %v683, %v682
      %v695 = vpack.c.bf16 %v685, %v684
      %v696 = vpack.c.bf16 %v687, %v686
      %v697 = vpack.c.bf16 %v689, %v688
      %v698 = vld [vmem:[%s4] sm:$0xf]
      %v699 = vld [vmem:[%s4 + $0x4] sm:$0xf]
      %v700 = vld [vmem:[%s4 + $0x8] sm:$0xf]
      %v701 = vld [vmem:[%s4 + $0xc] sm:$0xf]
      %v702 = vld [vmem:[%s4 + $0x10] sm:$0xf]
      %v703 = vld [vmem:[%s4 + $0x14] sm:$0xf]
      %v704 = vld [vmem:[%s4 + $0x18] sm:$0xf]
      %v705 = vld [vmem:[%s4 + $0x1c] sm:$0xf]
      %v706 = vld [vmem:[%s4 + $0x20] sm:$0xf]
      %v707 = vld [vmem:[%s4 + $0x24] sm:$0xf]
      %v708 = vld [vmem:[%s4 + $0x28] sm:$0xf]
      %v709 = vld [vmem:[%s4 + $0x2c] sm:$0xf]
      %v710 = vld [vmem:[%s4 + $0x30] sm:$0xf]
      %v711 = vld [vmem:[%s4 + $0x34] sm:$0xf]
      %v712 = vld [vmem:[%s4 + $0x38] sm:$0xf]
      %v713 = vld [vmem:[%s4 + $0x3c] sm:$0xf]
      %v730 = vunpack.c.l.b16 %v698
      %v731 = vunpack.c.l.b16 %v699
      %v732 = vunpack.c.l.b16 %v700
      %v733 = vunpack.c.l.b16 %v701
      %v734 = vunpack.c.l.b16 %v702
      %v735 = vunpack.c.l.b16 %v703
      %v736 = vunpack.c.l.b16 %v704
      %v737 = vunpack.c.l.b16 %v705
      %v738 = vunpack.c.l.b16 %v706
      %v739 = vunpack.c.l.b16 %v707
      %v740 = vunpack.c.l.b16 %v708
      %v741 = vunpack.c.l.b16 %v709
      %v742 = vunpack.c.l.b16 %v710
      %v743 = vunpack.c.l.b16 %v711
      %v744 = vunpack.c.l.b16 %v712
      %v745 = vunpack.c.l.b16 %v713
      %v746 = vpack.c.b16 %v731, %v730
      %v747 = vpack.c.b16 %v733, %v732
      %v748 = vpack.c.b16 %v735, %v734
      %v749 = vpack.c.b16 %v737, %v736
      %v750 = vpack.c.b16 %v739, %v738
      %v751 = vpack.c.b16 %v741, %v740
      %v752 = vpack.c.b16 %v743, %v742
      %v753 = vpack.c.b16 %v745, %v744
      %762 = vmatprep.subr.bf16.mxu0 0
      %763 = vmatpush1.bf16.msra.mxu0 %v746
      %764 = vmatprep.subr.bf16.mxu0 0
      %765 = vmatpush1.bf16.msra.mxu0 %v747
      %766 = vmatprep.subr.bf16.mxu0 0
      %767 = vmatpush1.bf16.msra.mxu0 %v748
      %768 = vmatprep.subr.bf16.mxu0 0
      %769 = vmatpush1.bf16.msra.mxu0 %v749
      %770 = vmatprep.subr.bf16.mxu0 0
      %771 = vmatpush1.bf16.msra.mxu0 %v750
      %772 = vmatprep.subr.bf16.mxu0 0
      %773 = vmatpush1.bf16.msra.mxu0 %v751
      %774 = vmatprep.subr.bf16.mxu0 0
      %775 = vmatpush1.bf16.msra.mxu0 %v752
      %776 = vmatprep.subr.bf16.mxu0 0
      %777 = vmatpush1.bf16.msra.mxu0 %v753
      %778 = vmatprep.subr.bf16.mxu0 0
      %779 = vmatpush1.bf16.msra.mxu0 0
      %780 = vmatprep.subr.bf16.mxu0 0
      %781 = vmatpush1.bf16.msra.mxu0 0
      %782 = vmatprep.subr.bf16.mxu0 0
      %783 = vmatpush1.bf16.msra.mxu0 0
      %784 = vmatprep.subr.bf16.mxu0 0
      %785 = vmatpush1.bf16.msra.mxu0 0
      %786 = vmatprep.subr.bf16.mxu0 0
      %787 = vmatpush1.bf16.msra.mxu0 0
      %788 = vmatprep.subr.bf16.mxu0 0
      %789 = vmatpush1.bf16.msra.mxu0 0
      %790 = vmatprep.subr.bf16.mxu0 0
      %791 = vmatpush1.bf16.msra.mxu0 0
      %792 = vmatprep.subr.bf16.mxu0 0
      %793 = vmatpush1.bf16.msra.mxu0 0
      %794 = vmatprep.mubr.bf16.mxu0 0
      %795 = vmatmul.mubr.bf16.gmra.mrb[0].mxu0 %v690
      %v796 = vpop.f32.mrb[0].mxu0
      %v797 = vadd.f32 0.0, %v796
      %v798 = vpop.f32.mrb[0].mxu0
      %v799 = vpop.f32.mrb[0].mxu0
      %v800 = vadd.f32 0.0, %v799
      %v801 = vpop.f32.mrb[0].mxu0
      %802 = vmatprep.mubr.bf16.mxu0 0
      %803 = vmatmul.mubr.bf16.gmra.mrb[0].mxu0 %v691
      %v804 = vpop.f32.mrb[0].mxu0
      %v805 = vadd.f32 0.0, %v804
      %v806 = vpop.f32.mrb[0].mxu0
      %v807 = vpop.f32.mrb[0].mxu0
      %v808 = vadd.f32 0.0, %v807
      %v809 = vpop.f32.mrb[0].mxu0
      %810 = vmatprep.mubr.bf16.mxu0 0
      %811 = vmatmul.mubr.bf16.gmra.mrb[0].mxu0 %v692
      %v812 = vpop.f32.mrb[0].mxu0
      %v813 = vadd.f32 0.0, %v812
      %v814 = vpop.f32.mrb[0].mxu0
      %v815 = vpop.f32.mrb[0].mxu0
      %v816 = vadd.f32 0.0, %v815
      %v817 = vpop.f32.mrb[0].mxu0
      %818 = vmatprep.mubr.bf16.mxu0 0
      %819 = vmatmul.mubr.bf16.gmra.mrb[0].mxu0 %v693
      %v820 = vpop.f32.mrb[0].mxu0
      %v821 = vadd.f32 0.0, %v820
      %v822 = vpop.f32.mrb[0].mxu0
      %v823 = vpop.f32.mrb[0].mxu0
      %v824 = vadd.f32 0.0, %v823
      %v825 = vpop.f32.mrb[0].mxu0
      %826 = vmatprep.mubr.bf16.mxu0 0
      %827 = vmatmul.mubr.bf16.gmra.mrb[0].mxu0 %v694
      %v828 = vpop.f32.mrb[0].mxu0
      %v829 = vadd.f32 0.0, %v828
      %v830 = vpop.f32.mrb[0].mxu0
      %v831 = vpop.f32.mrb[0].mxu0
      %v832 = vadd.f32 0.0, %v831
      %v833 = vpop.f32.mrb[0].mxu0
      %834 = vmatprep.mubr.bf16.mxu0 0
      %835 = vmatmul.mubr.bf16.gmra.mrb[0].mxu0 %v695
      %v836 = vpop.f32.mrb[0].mxu0
      %v837 = vadd.f32 0.0, %v836
      %v838 = vpop.f32.mrb[0].mxu0
      %v839 = vpop.f32.mrb[0].mxu0
      %v840 = vadd.f32 0.0, %v839
      %v841 = vpop.f32.mrb[0].mxu0
      %842 = vmatprep.mubr.bf16.mxu0 0
      %843 = vmatmul.mubr.bf16.gmra.mrb[0].mxu0 %v696
      %v844 = vpop.f32.mrb[0].mxu0
      %v845 = vadd.f32 0.0, %v844
      %v846 = vpop.f32.mrb[0].mxu0
      %v847 = vpop.f32.mrb[0].mxu0
      %v848 = vadd.f32 0.0, %v847
      %v849 = vpop.f32.mrb[0].mxu0
      %850 = vmatprep.mubr.bf16.mxu0 0
      %851 = vmatmul.mubr.bf16.gmra.mrb[0].mxu0 %v697
      %v852 = vpop.f32.mrb[0].mxu0
      %v853 = vadd.f32 0.0, %v852
      %v854 = vpop.f32.mrb[0].mxu0
      %v855 = vpop.f32.mrb[0].mxu0
      %v856 = vadd.f32 0.0, %v855
      %v857 = vpop.f32.mrb[0].mxu0
      %858 = vdwg.mxu0
      %v859 = vpack.c.bf16 %v800, %v797
      %v860 = vpack.c.bf16 %v808, %v805
      %v861 = vpack.c.bf16 %v816, %v813
      %v862 = vpack.c.bf16 %v824, %v821
      %v863 = vpack.c.bf16 %v832, %v829
      %v864 = vpack.c.bf16 %v840, %v837
      %v865 = vpack.c.bf16 %v848, %v845
      %v866 = vpack.c.bf16 %v856, %v853
      %v867 = vld [vmem:[%s5] sm:$0x1]
      %v869 = vlaneseq
      %v870 = vshrl.u32 %v869, 7
      %v871 = vsub.s32 0, %v870
      %v872 = vrot.slane %v867, %v871
      %874 = vmatprep.subr.bf16.mxu0 0
      %875 = vmatpush1.bf16.msra.mxu0 %v859
      %876 = vmatprep.subr.bf16.mxu0 0
      %877 = vmatpush1.bf16.msra.mxu0 %v860
      %878 = vmatprep.subr.bf16.mxu0 0
      %879 = vmatpush1.bf16.msra.mxu0 %v861
      %880 = vmatprep.subr.bf16.mxu0 0
      %881 = vmatpush1.bf16.msra.mxu0 %v862
      %882 = vmatprep.subr.bf16.mxu0 0
      %883 = vmatpush1.bf16.msra.mxu0 %v863
      %884 = vmatprep.subr.bf16.mxu0 0
      %885 = vmatpush1.bf16.msra.mxu0 %v864
      %886 = vmatprep.subr.bf16.mxu0 0
      %887 = vmatpush1.bf16.msra.mxu0 %v865
      %888 = vmatprep.subr.bf16.mxu0 0
      %889 = vmatpush1.bf16.msra.mxu0 %v866
      %890 = vmatprep.subr.bf16.mxu0 0
      %891 = vmatpush1.bf16.msra.mxu0 0
      %892 = vmatprep.subr.bf16.mxu0 0
      %893 = vmatpush1.bf16.msra.mxu0 0
      %894 = vmatprep.subr.bf16.mxu0 0
      %895 = vmatpush1.bf16.msra.mxu0 0
      %896 = vmatprep.subr.bf16.mxu0 0
      %897 = vmatpush1.bf16.msra.mxu0 0
      %898 = vmatprep.subr.bf16.mxu0 0
      %899 = vmatpush1.bf16.msra.mxu0 0
      %900 = vmatprep.subr.bf16.mxu0 0
      %901 = vmatpush1.bf16.msra.mxu0 0
      %902 = vmatprep.subr.bf16.mxu0 0
      %903 = vmatpush1.bf16.msra.mxu0 0
      %904 = vmatprep.subr.bf16.mxu0 0
      %905 = vmatpush1.bf16.msra.mxu0 0
      %906 = vmatprep.mubr.bf16.mxu0 0
      %907 = vmatmul.mubr.bf16.gmra.mrb[0].mxu0 %v337
      %v908 = vpop.f32.mrb[0].mxu0
      %v909 = vadd.f32 %v872, %v908
      %v910 = vpop.f32.mrb[0].mxu0
      %v911 = vpop.f32.mrb[0].mxu0
      %v912 = vadd.f32 %v872, %v911
      %v913 = vpop.f32.mrb[0].mxu0
      %914 = vmatprep.mubr.bf16.mxu0 0
      %915 = vmatmul.mubr.bf16.gmra.mrb[0].mxu0 %v338
      %v916 = vpop.f32.mrb[0].mxu0
      %v917 = vadd.f32 %v872, %v916
      %v918 = vpop.f32.mrb[0].mxu0
      %v919 = vpop.f32.mrb[0].mxu0
      %v920 = vadd.f32 %v872, %v919
      %v921 = vpop.f32.mrb[0].mxu0
      %922 = vmatprep.mubr.bf16.mxu0 0
      %923 = vmatmul.mubr.bf16.gmra.mrb[0].mxu0 %v339
      %v924 = vpop.f32.mrb[0].mxu0
      %v925 = vadd.f32 %v872, %v924
      %v926 = vpop.f32.mrb[0].mxu0
      %v927 = vpop.f32.mrb[0].mxu0
      %v928 = vadd.f32 %v872, %v927
      %v929 = vpop.f32.mrb[0].mxu0
      %930 = vmatprep.mubr.bf16.mxu0 0
      %931 = vmatmul.mubr.bf16.gmra.mrb[0].mxu0 %v340
      %v932 = vpop.f32.mrb[0].mxu0
      %v933 = vadd.f32 %v872, %v932
      %v934 = vpop.f32.mrb[0].mxu0
      %v935 = vpop.f32.mrb[0].mxu0
      %v936 = vadd.f32 %v872, %v935
      %v937 = vpop.f32.mrb[0].mxu0
      %938 = vmatprep.mubr.bf16.mxu0 0
      %939 = vmatmul.mubr.bf16.gmra.mrb[0].mxu0 %v341
      %v940 = vpop.f32.mrb[0].mxu0
      %v941 = vadd.f32 %v872, %v940
      %v942 = vpop.f32.mrb[0].mxu0
      %v943 = vpop.f32.mrb[0].mxu0
      %v944 = vadd.f32 %v872, %v943
      %v945 = vpop.f32.mrb[0].mxu0
      %946 = vmatprep.mubr.bf16.mxu0 0
      %947 = vmatmul.mubr.bf16.gmra.mrb[0].mxu0 %v342
      %v948 = vpop.f32.mrb[0].mxu0
      %v949 = vadd.f32 %v872, %v948
      %v950 = vpop.f32.mrb[0].mxu0
      %v951 = vpop.f32.mrb[0].mxu0
      %v952 = vadd.f32 %v872, %v951
      %v953 = vpop.f32.mrb[0].mxu0
      %954 = vmatprep.mubr.bf16.mxu0 0
      %955 = vmatmul.mubr.bf16.gmra.mrb[0].mxu0 %v343
      %v956 = vpop.f32.mrb[0].mxu0
      %v957 = vadd.f32 %v872, %v956
      %v958 = vpop.f32.mrb[0].mxu0
      %v959 = vpop.f32.mrb[0].mxu0
      %v960 = vadd.f32 %v872, %v959
      %v961 = vpop.f32.mrb[0].mxu0
      %962 = vmatprep.mubr.bf16.mxu0 0
      %963 = vmatmul.mubr.bf16.gmra.mrb[0].mxu0 %v344
      %v964 = vpop.f32.mrb[0].mxu0
      %v965 = vadd.f32 %v872, %v964
      %v966 = vpop.f32.mrb[0].mxu0
      %v967 = vpop.f32.mrb[0].mxu0
      %v968 = vadd.f32 %v872, %v967
      %v969 = vpop.f32.mrb[0].mxu0
      %970 = vdwg.mxu0
      %v971 = vmax.f32 %v909, 0.0
      %v972 = vmax.f32 %v912, 0.0
      %v973 = vmax.f32 %v917, 0.0
      %v974 = vmax.f32 %v920, 0.0
      %v975 = vmax.f32 %v925, 0.0
      %v976 = vmax.f32 %v928, 0.0
      %v977 = vmax.f32 %v933, 0.0
      %v978 = vmax.f32 %v936, 0.0
      %v979 = vmax.f32 %v941, 0.0
      %v980 = vmax.f32 %v944, 0.0
      %v981 = vmax.f32 %v949, 0.0
      %v982 = vmax.f32 %v952, 0.0
      %v983 = vmax.f32 %v957, 0.0
      %v984 = vmax.f32 %v960, 0.0
      %v985 = vmax.f32 %v965, 0.0
      %v986 = vmax.f32 %v968, 0.0
      %v987 = vpack.c.bf16 %v972, %v971
      %v988 = vpack.c.bf16 %v974, %v973
      %v989 = vpack.c.bf16 %v976, %v975
      %v990 = vpack.c.bf16 %v978, %v977
      %v991 = vpack.c.bf16 %v980, %v979
      %v992 = vpack.c.bf16 %v982, %v981
      %v993 = vpack.c.bf16 %v984, %v983
      %v994 = vpack.c.bf16 %v986, %v985
      %v1003 = vunpack.c.l.b16 %v987
      %v1004 = vunpack.c.h.b16 %v987
      %v1005 = vunpack.c.l.b16 %v988
      %v1006 = vunpack.c.h.b16 %v988
      %v1007 = vunpack.c.l.b16 %v989
      %v1008 = vunpack.c.h.b16 %v989
      %v1009 = vunpack.c.l.b16 %v990
      %v1010 = vunpack.c.h.b16 %v990
      %v1011 = vunpack.c.l.b16 %v991
      %v1012 = vunpack.c.h.b16 %v991
      %v1013 = vunpack.c.l.b16 %v992
      %v1014 = vunpack.c.h.b16 %v992
      %v1015 = vunpack.c.l.b16 %v993
      %v1016 = vunpack.c.h.b16 %v993
      %v1017 = vunpack.c.l.b16 %v994
      %v1018 = vunpack.c.h.b16 %v994
      %v1019 = vpack.c.b16 %v1003, %v1003
      %v1020 = vpack.c.b16 %v1004, %v1004
      %v1021 = vpack.c.b16 %v1005, %v1005
      %v1022 = vpack.c.b16 %v1006, %v1006
      %v1023 = vpack.c.b16 %v1007, %v1007
      %v1024 = vpack.c.b16 %v1008, %v1008
      %v1025 = vpack.c.b16 %v1009, %v1009
      %v1026 = vpack.c.b16 %v1010, %v1010
      %v1027 = vpack.c.b16 %v1011, %v1011
      %v1028 = vpack.c.b16 %v1012, %v1012
      %v1029 = vpack.c.b16 %v1013, %v1013
      %v1030 = vpack.c.b16 %v1014, %v1014
      %v1031 = vpack.c.b16 %v1015, %v1015
      %v1032 = vpack.c.b16 %v1016, %v1016
      %v1033 = vpack.c.b16 %v1017, %v1017
      %v1034 = vpack.c.b16 %v1018, %v1018
      %1051 = vst [vmem:[%s271] sm:$0xf] %v1019
      %1052 = vst [vmem:[%s271 + $0x4] sm:$0xf] %v1020
      %1053 = vst [vmem:[%s271 + $0x8] sm:$0xf] %v1021
      %1054 = vst [vmem:[%s271 + $0xc] sm:$0xf] %v1022
      %1055 = vst [vmem:[%s271 + $0x10] sm:$0xf] %v1023
      %1056 = vst [vmem:[%s271 + $0x14] sm:$0xf] %v1024
      %1057 = vst [vmem:[%s271 + $0x18] sm:$0xf] %v1025
      %1058 = vst [vmem:[%s271 + $0x1c] sm:$0xf] %v1026
      %1059 = vst [vmem:[%s271 + $0x20] sm:$0xf] %v1027
      %1060 = vst [vmem:[%s271 + $0x24] sm:$0xf] %v1028
      %1061 = vst [vmem:[%s271 + $0x28] sm:$0xf] %v1029
      %1062 = vst [vmem:[%s271 + $0x2c] sm:$0xf] %v1030
      %1063 = vst [vmem:[%s271 + $0x30] sm:$0xf] %v1031
      %1064 = vst [vmem:[%s271 + $0x34] sm:$0xf] %v1032
      %1065 = vst [vmem:[%s271 + $0x38] sm:$0xf] %v1033
      %1066 = vst [vmem:[%s271 + $0x3c] sm:$0xf] %v1034
      %p1067 = scmp.lt.s32.totalorder %s17, 1
      %s1068 = scalar_select %p1067, %s17, 1
      %s1069 = smul.addr %s1068, 16
      %s1070 = smul.addr %s1069, 4
      %s1071 = scalar_lea.vmem %s6, %s1070
      // Predicated region
      $region45: #{gcnn_forward.1} parent=43 // pred_check
        %p1072 = pneg %p171
      $region46: #{gcnn_forward.1} parent=43 // pred_check_branch
        %1074 = sbr.rel (%p1072) target = $region48
      $region47: #{gcnn_forward.1} parent=43 // pred_region
        _
      $region48: #{gcnn_forward.1} parent=43 // pred_fallthru
        _
    $region44: #{gcnn_forward.1} parent=5 // pred_fallthru
      _
    %p1075 = scmp.le.s32.totalorder 2, %s12
    // Predicated region
    $region49: #{gcnn_forward.1} parent=5 // pred_check
      %p1076 = pneg %p1075
    $region50: #{gcnn_forward.1} parent=5 // pred_check_branch
      %1078 = sbr.rel (%p1076) target = $region52
    $region51: #{gcnn_forward.1} parent=5 // pred_region
      %s1079 = ssub.s32 %s12, 2
      // Predicated region
      $region53: #{gcnn_forward.1} parent=51 // pred_check
        %p1080 = pneg %p177
      $region54: #{gcnn_forward.1} parent=51 // pred_check_branch
        %1082 = sbr.rel (%p1080) target = $region56
      $region55: #{gcnn_forward.1} parent=51 // pred_region
        %p1083 = scmp.lt.s32.totalorder %s18, 1
        %s1084 = scalar_select %p1083, %s18, 1
        %s1085 = smul.addr %s1084, 16
        %s1086 = smul.addr %s1085, 4
        %s1087 = scalar_lea.vmem %s6, %s1086
      $region56: #{gcnn_forward.1} parent=51 // pred_fallthru
        _
    $region52: #{gcnn_forward.1} parent=5 // pred_fallthru
      _
  $region6: #{gcnn_forward.1} parent=0 // loop_footer
    %s16 = sadd.s32 1, %s12
  $region7: #{gcnn_forward.1} parent=0 // loop_footer_branch
    %11 = sbr.rel target = $region3
  $region8: #{gcnn_forward.1} parent=0 // loop_exit
    _

</llo_original>
